<compile_context>
chip_gen: v7x
topology: tpu7x:2x2x1
jax: 0.10.0
libtpu: 0.0.40
codegen_flags: <defaults>
</compile_context>

<pallas_src>
import jax
import jax.numpy as jnp
from jax.experimental import pallas as pl
from jax.experimental.pallas import tpu as pltpu


def _round_up(x: int, m: int) -> int:
    return (x + m - 1) // m * m


def bilinear_matrix(out_size: int, in_size: int) -> jnp.ndarray:
    """Interpolation matrix M (out_size, in_size) for align_corners=True bilinear."""
    i = jnp.arange(out_size, dtype=jnp.float32)
    if out_size == 1:
        src = jnp.zeros((out_size,), jnp.float32)
    else:
        src = i * (in_size - 1) / (out_size - 1)
    h0 = jnp.clip(jnp.floor(src).astype(jnp.int32), 0, in_size - 1)
    h1 = jnp.clip(h0 + 1, 0, in_size - 1)
    lam = src - h0.astype(jnp.float32)
    rows = jnp.arange(out_size)
    M = jnp.zeros((out_size, in_size), jnp.float32)
    M = M.at[rows, h0].add(1.0 - lam)
    M = M.at[rows, h1].add(lam)
    return M


def _auto_batch_block(n: int) -> int:
    """Largest divisor Nb of N (<=8) that still leaves >=2 grid steps (keeps both v7x TCs busy).

    On single-TC chips (v5e/v6e) calling upsample_conv(..., nb=N) collapses the grid fully,
    which is strictly better there.
    """
    if n < 2:
        return max(n, 1)
    best = 1
    for cand in range(2, min(n, 8) + 1):
        if n % cand == 0 and n // cand >= 2:
            best = cand
    return best


def _upsample_conv_kernel(x_ref, a_ref, g_ref, b_ref, o_ref, u_ref):
    # x_ref : (Nb, 2H, 2*C_in*W)     block-diagonal packed input, Nb sub-batches (lane-dense)
    # a_ref : (Hp, 2H)               row-interp matrix with both conv row taps folded in
    # g_ref : (2*C_in*W, Ltot)       col-interp x conv-weight matrix, (j, oc) interleaved on lanes
    # b_ref : (1, Ltot)              bias replicated over j (interleaved packing)
    # o_ref : (Nb*Hp, Ltot)          lane-dense packed output (Ltot multiple of 128)
    # u_ref : (Nb*Hp, 2*C_in*W)      VMEM scratch for the concatenated row-interp results
    nb = x_ref.shape[0]
    hp = a_ref.shape[0]
    a = a_ref[...]
    # One small MXU matmul per sub-batch (static unroll), stacked along M in scratch.
    for bb in range(nb):
        u_ref[bb * hp:(bb + 1) * hp, :] = jnp.dot(
            a, x_ref[bb], preferred_element_type=jnp.float32)
    # Single big MXU contraction: (Nb*Hp, 128) @ (128, Ltot), then one VPU bias add.
    acc = jnp.dot(u_ref[...], g_ref[...], preferred_element_type=jnp.float32)
    o_ref[...] = (acc + b_ref[...]).astype(o_ref.dtype)


def upsample_conv(x, weight, bias, nb=None):
    """x: (N, C_in, H, W) f32; weight: (C_out, C_in, 2, 2); bias: (C_out,).

    Returns (N, C_out, 2H-1, 2W-1) f32 — same as
    nn.Upsample(scale_factor=2, mode='bilinear', align_corners=True) + Conv2d(k=2).
    """
    n, c_in, h, w = x.shape
    c_out = weight.shape[0]
    h2, w2 = 2 * h, 2 * w            # bilinear x2
    hc, wc = h2 - 1, w2 - 1          # conv2d k=2, stride=1, valid padding
    cw = c_in * w

    hp = _round_up(hc, 8)                        # sublane-aligned row count
    ltot = _round_up(c_out * wc, 128)            # pad TOTAL lane count only (general C_out)

    if nb is None:
        nb = _auto_batch_block(n)
    assert n % nb == 0, (n, nb)

    f32 = jnp.float32
    uh = bilinear_matrix(h2, h)                  # (H2, H)
    uw = bilinear_matrix(w2, w)                  # (W2, W)

    # A_cat: both conv row taps folded along K.  A_cat[i, di*H + h] = UH[i+di, h].
    a_cat = jnp.zeros((hp, 2 * h), f32)
    a_cat = a_cat.at[:hc, :h].set(uh[0:hc])
    a_cat = a_cat.at[:hc, h:].set(uh[1:hc + 1])

    # G_cat: column interp + conv weights, di folded along K, (j, oc) interleaved on lanes.
    #   G_cat[di*C_in*W + ic*W + w, j*C_out + oc] = sum_dj weight[oc,ic,di,dj] * UW[j+dj, w]
    b_shift = jnp.stack([uw[0:wc], uw[1:wc + 1]])                   # (2, wc, W) = [dj, j, w]
    g_cat = jnp.einsum('oiab,bjw->aiwjo', weight.astype(f32), b_shift)  # (2, C_in, W, wc, C_out)
    g_cat = g_cat.reshape(2 * cw, wc * c_out)
    g_cat = jnp.pad(g_cat, ((0, 0), (0, ltot - wc * c_out)))

    # Bias row in the same interleaved (j, oc) packing.
    brow = jnp.pad(jnp.tile(bias.astype(f32), wc), (0, ltot - wc * c_out)).reshape(1, ltot)

    # Input packing: X_cat[n, di*H + h, di*C_in*W + ic*W + w] = x[n, ic, h, w]
    # (block-diagonal over di -> the kernel needs one matmul per sub-batch and the
    #  streamed tile is 2*C_in*W = 128 lanes wide).
    xr = jnp.transpose(x.astype(f32), (0, 2, 1, 3)).reshape(n, h, cw)
    x_cat = jnp.zeros((n, 2 * h, 2 * cw), f32)
    x_cat = x_cat.at[:, :h, :cw].set(xr)
    x_cat = x_cat.at[:, h:, cw:].set(xr)

    # VMEM guard for scaled-up shapes (double-buffered inputs + resident operands + scratch).
    resident_bytes = 4 * (a_cat.size + g_cat.size + brow.size)
    per_step_bytes = 4 * (nb * 2 * h * 2 * cw + nb * hp * ltot + nb * hp * 2 * cw)
    # TODO(synk): when G_cat grows toward tens of MiB (production C/W), add a grid axis
    # tiling Ltot into 512-1024 lane tiles instead of keeping G_cat fully resident.
    assert 2 * (resident_bytes + per_step_bytes) < 24 * 1024 * 1024, \
        "operands too large for fully-resident G_cat; add a lane-tile grid axis over Ltot"

    out_flat = pl.pallas_call(
        _upsample_conv_kernel,
        out_shape=jax.ShapeDtypeStruct((n * hp, ltot), f32),
        grid=(n // nb,),
        in_specs=[
            pl.BlockSpec((nb, 2 * h, 2 * cw), lambda i: (i, 0, 0)),   # per-step sub-batches
            pl.BlockSpec((hp, 2 * h), lambda i: (0, 0)),              # resident A_cat
            pl.BlockSpec((2 * cw, ltot), lambda i: (0, 0)),           # resident G_cat
            pl.BlockSpec((1, ltot), lambda i: (0, 0)),                # resident bias row
        ],
        out_specs=pl.BlockSpec((nb * hp, ltot), lambda i: (i, 0)),
        scratch_shapes=[pltpu.VMEM((nb * hp, 2 * cw), f32)],
        compiler_params=pltpu.CompilerParams(
            dimension_semantics=("parallel",),
            vmem_limit_bytes=32 * 1024 * 1024),
    )(x_cat, a_cat, g_cat, brow)

    # Unpack: (N*Hp, Ltot) -> (N, C_out, hc, wc).  Kept only for NCHW API parity; downstream
    # kernels could consume the packed layout directly and skip this transpose.
    out = out_flat.reshape(n, hp, ltot)[:, :hc, :wc * c_out]
    out = out.reshape(n, hc, wc, c_out)
    out = jnp.transpose(out, (0, 3, 1, 2))
    return out


def upsample_conv_reference(x, weight, bias):
    """Pure-JAX reference (independent math path, no Pallas) for validation."""
    uh = bilinear_matrix(2 * x.shape[2], x.shape[2])
    uw = bilinear_matrix(2 * x.shape[3], x.shape[3])
    up = jnp.einsum('oh,nchw->ncow', uh, x.astype(jnp.float32))
    up = jnp.einsum('ncow,vw->ncov', up, uw)
    out = jax.lax.conv_general_dilated(
        up, weight.astype(jnp.float32), window_strides=(1, 1), padding='VALID',
        dimension_numbers=('NCHW', 'OIHW', 'NCHW'))
    return out + bias[None, :, None, None].astype(jnp.float32)


def _check(key, n, c_in, c_out, h, w):
    k_x, k_w, k_b = jax.random.split(key, 3)
    x = jax.random.normal(k_x, (n, c_in, h, w), dtype=jnp.float32)
    weight = 0.1 * jax.random.normal(k_w, (c_out, c_in, 2, 2), dtype=jnp.float32)
    bias = 0.1 * jax.random.normal(k_b, (c_out,), dtype=jnp.float32)

    out = jax.block_until_ready(upsample_conv(x, weight, bias))
    ref = jax.block_until_ready(upsample_conv_reference(x, weight, bias))
    assert out.shape == (n, c_out, 2 * h - 1, 2 * w - 1), out.shape
    assert jnp.allclose(out, ref, atol=1e-4, rtol=1e-4), float(jnp.max(jnp.abs(out - ref)))


if __name__ == "__main__":
    key = jax.random.PRNGKey(0)
    k1, k2, k3 = jax.random.split(key, 3)

    # Main case from the spec: batch=2, 4->8 channels, 16x16 spatial.
    _check(k1, n=2, c_in=4, c_out=8, h=16, w=16)
    # Exercises batch blocking (N=4 -> Nb=2, one big M=64 matmul per step).
    _check(k2, n=4, c_in=4, c_out=8, h=16, w=16)
    # Exercises the general (non-power-of-two) C_out lane packing.
    _check(k3, n=3, c_in=5, c_out=3, h=8, w=8)

    print("KERNEL_OK")
</pallas_src>

<mosaic_0001>
module attributes {stable_mosaic.version = 11 : i64} {
  func.func @_upsample_conv_kernel(%arg0: i32, %arg1: memref<1x32x128xf32, #tpu.memory_space<vmem>>, %arg2: memref<32x32xf32, #tpu.memory_space<vmem>>, %arg3: memref<128x256xf32, #tpu.memory_space<vmem>>, %arg4: memref<1x256xf32, #tpu.memory_space<vmem>>, %arg5: memref<32x256xf32, #tpu.memory_space<vmem>>, %arg6: memref<32x128xf32, #tpu.memory_space<vmem>>) attributes {dimension_semantics = [#tpu.dimension_semantics<parallel>], iteration_bounds = array<i64: 2>, scalar_prefetch = 0 : i64, scratch_operands = 1 : i64, tpu.core_type = #tpu.core_type<tc>, window_params = [{transform_indices = @transform_0, window_bounds = array<i64: 1, 32, 128>}, {pipeline_mode = #tpu.pipeline_mode<synchronous>, transform_indices = @transform_1, window_bounds = array<i64: 32, 32>}, {pipeline_mode = #tpu.pipeline_mode<synchronous>, transform_indices = @transform_2, window_bounds = array<i64: 128, 256>}, {pipeline_mode = #tpu.pipeline_mode<synchronous>, transform_indices = @transform_3, window_bounds = array<i64: 1, 256>}, {transform_indices = @transform_4, window_bounds = array<i64: 32, 256>}]} {
    %c0 = arith.constant 0 : index
    %c0_0 = arith.constant 0 : index
    %0 = vector.load %arg2[%c0, %c0_0] : memref<32x32xf32, #tpu.memory_space<vmem>>, vector<32x32xf32>
    %c0_1 = arith.constant 0 : index
    %c0_2 = arith.constant 0 : index
    %c0_3 = arith.constant 0 : index
    %1 = vector.load %arg1[%c0_1, %c0_2, %c0_3] : memref<1x32x128xf32, #tpu.memory_space<vmem>>, vector<1x32x128xf32>
    %2 = vector.shape_cast %1 : vector<1x32x128xf32> to vector<32x128xf32>
    %cst = arith.constant dense<0.000000e+00> : vector<32x128xf32>
    %3 = tpu.matmul %0, %2, %cst {dimension_numbers = #tpu.dot_dimension_numbers<[1], [0], [0], [1], [0, 0, 1, 1], [], []>} : vector<32x32xf32>, vector<32x128xf32>, vector<32x128xf32> -> vector<32x128xf32>
    %c0_4 = arith.constant 0 : index
    %c0_5 = arith.constant 0 : index
    %4 = vector.load %arg6[%c0_4, %c0_5] : memref<32x128xf32, #tpu.memory_space<vmem>>, vector<32x128xf32>
    tpu.vector_store %arg6[%c0_4, %c0_5], %3 {strides = array<i32>} : memref<32x128xf32, #tpu.memory_space<vmem>>, vector<32x128xf32>,
    %c0_6 = arith.constant 0 : index
    %c0_7 = arith.constant 0 : index
    %5 = vector.load %arg6[%c0_6, %c0_7] : memref<32x128xf32, #tpu.memory_space<vmem>>, vector<32x128xf32>
    %c0_8 = arith.constant 0 : index
    %c0_9 = arith.constant 0 : index
    %6 = vector.load %arg3[%c0_8, %c0_9] : memref<128x256xf32, #tpu.memory_space<vmem>>, vector<128x256xf32>
    %cst_10 = arith.constant dense<0.000000e+00> : vector<32x256xf32>
    %7 = tpu.matmul %5, %6, %cst_10 {dimension_numbers = #tpu.dot_dimension_numbers<[1], [0], [0], [1], [0, 0, 1, 1], [], []>} : vector<32x128xf32>, vector<128x256xf32>, vector<32x256xf32> -> vector<32x256xf32>
    %c0_11 = arith.constant 0 : index
    %c0_12 = arith.constant 0 : index
    %8 = vector.load %arg4[%c0_11, %c0_12] : memref<1x256xf32, #tpu.memory_space<vmem>>, vector<1x256xf32>
    %9 = vector.broadcast %8 : vector<1x256xf32> to vector<32x256xf32>
    %10 = arith.addf %7, %9 : vector<32x256xf32>
    %c0_13 = arith.constant 0 : index
    %c0_14 = arith.constant 0 : index
    %11 = vector.load %arg5[%c0_13, %c0_14] : memref<32x256xf32, #tpu.memory_space<vmem>>, vector<32x256xf32>
    tpu.vector_store %arg5[%c0_13, %c0_14], %10 {strides = array<i32>} : memref<32x256xf32, #tpu.memory_space<vmem>>, vector<32x256xf32>,
    return
  }
  func.func @transform_0(%arg0: i32) -> (i32, i32, i32) {
    %c0_i32 = arith.constant 0 : i32
    %c0_i32_0 = arith.constant 0 : i32
    %c0_i32_1 = arith.constant 0 : i32
    return %arg0, %c0_i32, %c0_i32_0 : i32, i32, i32
  }
  func.func @transform_1(%arg0: i32) -> (i32, i32) {
    %c0_i32 = arith.constant 0 : i32
    %c0_i32_0 = arith.constant 0 : i32
    %c0_i32_1 = arith.constant 0 : i32
    return %c0_i32, %c0_i32_0 : i32, i32
  }
  func.func @transform_2(%arg0: i32) -> (i32, i32) {
    %c0_i32 = arith.constant 0 : i32
    %c0_i32_0 = arith.constant 0 : i32
    %c0_i32_1 = arith.constant 0 : i32
    return %c0_i32, %c0_i32_0 : i32, i32
  }
  func.func @transform_3(%arg0: i32) -> (i32, i32) {
    %c0_i32 = arith.constant 0 : i32
    %c0_i32_0 = arith.constant 0 : i32
    %c0_i32_1 = arith.constant 0 : i32
    return %c0_i32, %c0_i32_0 : i32, i32
  }
  func.func @transform_4(%arg0: i32) -> (i32, i32) {
    %c0_i32 = arith.constant 0 : i32
    %c0_i32_0 = arith.constant 0 : i32
    return %arg0, %c0_i32 : i32, i32
  }
}

</mosaic_0001>

<llo_original>
// kernel: tpu_custom_call.1
$region0: #{tpu_custom_call.1}
  #allocation0 [shape = 'u32[]', space=smem, size = 0x4, offset = 0x4, fixed_abs, tag = 'smem constant byte address 0x4 - core index']
  #allocation1 [shape = 'u32[144,128]{1,0:T(1,128)}', space=vmem, size = 0x12000, scoped, tag = 'internal scratch']
  #allocation2 [shape = 'f32[32,128]{1,0:T(8,128)}', space=vmem, size = 0x4000, scoped, tag = 'scratch operand']
  %s0 = inlined_call_operand.hbm [shape: f32[2,32,128], index: 0, kind: input, shape index: {}]
  %s1 = inlined_call_operand.hbm [shape: f32[32,32], index: 1, kind: input, shape index: {}]
  %s2 = inlined_call_operand.hbm [shape: f32[128,256], index: 2, kind: input, shape index: {}]
  %s3 = inlined_call_operand.vmem [shape: f32[1,256], index: 3, kind: input, shape index: {}]
  %s4 = inlined_call_operand.hbm [shape: f32[64,256], index: 4, kind: output, shape index: {}]
  %s5 = sld [smem:[#allocation0]]
  $region61: #{tpu_custom_call.1} parent=0
    _
  %s7 = ssub.s32 1, %s5
  %s8 = scalar_select 0, %s7, %s5
  $region1: #{tpu_custom_call.1} parent=0
    #allocation3 [shape = 'u8[32768]{0}', space=vmem, size = 0x8000, scoped, tag = 'input window, operand 0']
    #allocation4 [shape = 's32[2]{0}', space=sflag, size = 0x8, scoped, tag = 'scoped memory for tpu_custom_call.1']
    #allocation5 [shape = 's32[2]{0}', space=sflag, size = 0x8, scoped, tag = 'scoped memory for tpu_custom_call.1']
    #allocation6 [shape = 'u8[16384]{0}', space=vmem, size = 0x4000, scoped, tag = 'input window, operand 1, single buffered']
    #allocation7 [shape = 's32[1]{0}', space=sflag, size = 0x4, scoped, tag = 'scoped memory for tpu_custom_call.1']
    #allocation8 [shape = 'u8[131072]{0}', space=vmem, size = 0x20000, scoped, tag = 'input window, operand 2, single buffered']
    #allocation9 [shape = 'u8[65536]{0}', space=vmem, size = 0x10000, scoped, tag = 'output window, operand 0']
    %9 = vsyncpa [#allocation4], 0
    %s10 = scalar_lea.sflag [#allocation4], 1
    %11 = vsyncpa %s10, 0
    %12 = vsyncpa [#allocation7], 0
    %13 = vsyncpa [#allocation5], 0
    %s14 = scalar_lea.sflag [#allocation5], 1
    %15 = vsyncpa %s14, 0
    loop: start=0, step=1, limit=4
    $region2: #{tpu_custom_call.1} parent=1 // loop_pre_header
      _
    $region3: #{tpu_custom_call.1} parent=1 // loop_header
      %s17 = sphi 0, %s21
      %p18 = scmp.ge.s32.totalorder %s17, 4
      %s27 = sphi 0, %s29
      %s30 = sphi 0, %s27
      %s31 = sphi 0, %s30
      %s47 = sphi 0, %s31
      %s51 = sphi 0, %s51
      %s53 = sphi 0, %s51
      %s54 = sphi 0, %s53
      %s68 = sphi 0, %s54
      %s72 = sphi 0, %s72
      %s74 = sphi 0, %s72
      %s75 = sphi 0, %s74
      %s89 = sphi 0, %s75
      %s93 = sphi 0, %s93
      %s95 = sphi 0, %s93
      %s96 = sphi 0, %s95
      %s110 = sphi 0, %s96
      %s116 = sphi 0, %s118
      %s119 = sphi 0, %s116
      %s120 = sphi 0, %s119
      %s136 = sphi 0, %s120
    $region4: #{tpu_custom_call.1} parent=1 // loop_header_branch
      %20 = sbr.rel (%p18) target = $region8
    $region5: #{tpu_custom_call.1} parent=1 // loop_body
      %s22 = ssub.s32 %s17, 1
      %s23 = ssub.s32 %s17, 2
      %s24 = sadd.s32 %s17, 1
      %s25 = ssub.s32 %s17, %s24
      %p26 = scmp.eq.s32.totalorder %s25, 0
      %s28 = sadd.s32 %s27, 1
      %s29 = scalar_select %p26, %s27, %s28
      %p32 = pneg %p26
      %p33 = scmp.eq.s32.totalorder %s17, 1
      %p34 = por %p32, %p33
      %p35 = scmp.ne.s32.totalorder %s27, %s30
      %p36 = scmp.eq.s32.totalorder %s17, 0
      %p37 = por %p35, %p36
      %p38 = scmp.ne.s32.totalorder %s27, %s30
      %p39 = scmp.eq.s32.totalorder %s22, 1
      %p40 = por %p38, %p39
      %p41 = scmp.ne.s32.totalorder %s30, %s31
      %p42 = scmp.eq.s32.totalorder %s22, 0
      %p43 = por %p41, %p42
      %p44 = scmp.ne.s32.totalorder %s30, %s31
      %p45 = scmp.eq.s32.totalorder %s23, 1
      %p46 = por %p44, %p45
      %p48 = scmp.ne.s32.totalorder %s31, %s47
      %p49 = scmp.eq.s32.totalorder %s23, 0
      %p50 = por %p48, %p49
      %s52 = sadd.s32 %s51, 1
      %p55 = scmp.eq.s32.totalorder %s17, 1
      %p56 = scmp.ne.s32.totalorder %s51, %s53
      %p57 = scmp.eq.s32.totalorder %s17, 0
      %p58 = por %p56, %p57
      %p59 = scmp.ne.s32.totalorder %s51, %s53
      %p60 = scmp.eq.s32.totalorder %s22, 1
      %p61 = por %p59, %p60
      %p62 = scmp.ne.s32.totalorder %s53, %s54
      %p63 = scmp.eq.s32.totalorder %s22, 0
      %p64 = por %p62, %p63
      %p65 = scmp.ne.s32.totalorder %s53, %s54
      %p66 = scmp.eq.s32.totalorder %s23, 1
      %p67 = por %p65, %p66
      %p69 = scmp.ne.s32.totalorder %s54, %s68
      %p70 = scmp.eq.s32.totalorder %s23, 0
      %p71 = por %p69, %p70
      %s73 = sadd.s32 %s72, 1
      %p76 = scmp.eq.s32.totalorder %s17, 1
      %p77 = scmp.ne.s32.totalorder %s72, %s74
      %p78 = scmp.eq.s32.totalorder %s17, 0
      %p79 = por %p77, %p78
      %p80 = scmp.ne.s32.totalorder %s72, %s74
      %p81 = scmp.eq.s32.totalorder %s22, 1
      %p82 = por %p80, %p81
      %p83 = scmp.ne.s32.totalorder %s74, %s75
      %p84 = scmp.eq.s32.totalorder %s22, 0
      %p85 = por %p83, %p84
      %p86 = scmp.ne.s32.totalorder %s74, %s75
      %p87 = scmp.eq.s32.totalorder %s23, 1
      %p88 = por %p86, %p87
      %p90 = scmp.ne.s32.totalorder %s75, %s89
      %p91 = scmp.eq.s32.totalorder %s23, 0
      %p92 = por %p90, %p91
      %s94 = sadd.s32 %s93, 1
      %p97 = scmp.eq.s32.totalorder %s17, 1
      %p98 = scmp.ne.s32.totalorder %s93, %s95
      %p99 = scmp.eq.s32.totalorder %s17, 0
      %p100 = por %p98, %p99
      %p101 = scmp.ne.s32.totalorder %s93, %s95
      %p102 = scmp.eq.s32.totalorder %s22, 1
      %p103 = por %p101, %p102
      %p104 = scmp.ne.s32.totalorder %s95, %s96
      %p105 = scmp.eq.s32.totalorder %s22, 0
      %p106 = por %p104, %p105
      %p107 = scmp.ne.s32.totalorder %s95, %s96
      %p108 = scmp.eq.s32.totalorder %s23, 1
      %p109 = por %p107, %p108
      %p111 = scmp.ne.s32.totalorder %s96, %s110
      %p112 = scmp.eq.s32.totalorder %s23, 0
      %p113 = por %p111, %p112
      %s114 = ssub.s32 %s17, %s24
      %p115 = scmp.eq.s32.totalorder %s114, 0
      %s117 = sadd.s32 %s116, 1
      %s118 = scalar_select %p115, %s116, %s117
      %p121 = pneg %p115
      %p122 = scmp.eq.s32.totalorder %s17, 1
      %p123 = por %p121, %p122
      %p124 = scmp.ne.s32.totalorder %s116, %s119
      %p125 = scmp.eq.s32.totalorder %s17, 0
      %p126 = por %p124, %p125
      %p127 = scmp.ne.s32.totalorder %s116, %s119
      %p128 = scmp.eq.s32.totalorder %s22, 1
      %p129 = por %p127, %p128
      %p130 = scmp.ne.s32.totalorder %s119, %s120
      %p131 = scmp.eq.s32.totalorder %s22, 0
      %p132 = por %p130, %p131
      %p133 = scmp.ne.s32.totalorder %s119, %s120
      %p134 = scmp.eq.s32.totalorder %s23, 1
      %p135 = por %p133, %p134
      %p137 = scmp.ne.s32.totalorder %s120, %s136
      %p138 = scmp.eq.s32.totalorder %s23, 0
      %p139 = por %p137, %p138
      %p140 = scmp.le.s32.totalorder 1, %s17
      %p141 = scmp.lt.s32.totalorder %s17, 3
      %p142 = pnand %p140, %p141
      %p143 = pneg %p142
      // Predicated region
      $region9: #{tpu_custom_call.1} parent=5 // pred_check
        _
      $region10: #{tpu_custom_call.1} parent=5 // pred_check_branch
        %145 = sbr.rel (%p142) target = $region12
      $region11: #{tpu_custom_call.1} parent=5 // pred_region
        %s146 = ssub.s32 %s17, 1
        // Predicated region
        $region13: #{tpu_custom_call.1} parent=11 // pred_check
          %p147 = pneg %p64
        $region14: #{tpu_custom_call.1} parent=11 // pred_check_branch
          %149 = sbr.rel (%p147) target = $region16
        $region15: #{tpu_custom_call.1} parent=11 // pred_region
          %s151 = ssub.s32 512, 512
          %152 = vsyncadd [#allocation7], %s151
          %s153 = sshll.u32 [#allocation6], 4
          %s154 = int_to_ptr.vmem [resolvable:$true] %s153
          %159 = dma.hbm_to_vmem [thread:$0]  %s1, 512, %s154, [#allocation7], 128, 128, 8
        $region16: #{tpu_custom_call.1} parent=11 // pred_fallthru
          _
        // Predicated region
        $region17: #{tpu_custom_call.1} parent=11 // pred_check
          %p160 = pneg %p85
        $region18: #{tpu_custom_call.1} parent=11 // pred_check_branch
          %162 = sbr.rel (%p160) target = $region20
        $region19: #{tpu_custom_call.1} parent=11 // pred_region
          %s164 = ssub.s32 4096, 4096
          %165 = vsyncadd [#allocation7], %s164
          %s166 = sshll.u32 [#allocation8], 4
          %s167 = int_to_ptr.vmem [resolvable:$true] %s166
          %172 = dma.hbm_to_vmem [thread:$0]  %s2, 4096, %s167, [#allocation7], 256, 256, 16
        $region20: #{tpu_custom_call.1} parent=11 // pred_fallthru
          _
        // Predicated region
        $region21: #{tpu_custom_call.1} parent=11 // pred_check
          %p173 = pneg %p106
        $region22: #{tpu_custom_call.1} parent=11 // pred_check_branch
          %175 = sbr.rel (%p173) target = $region24
        $region23: #{tpu_custom_call.1} parent=11 // pred_region
          _
        $region24: #{tpu_custom_call.1} parent=11 // pred_fallthru
          _
      $region12: #{tpu_custom_call.1} parent=5 // pred_fallthru
        _
      %p176 = scmp.lt.s32.totalorder %s17, 2
      // Predicated region
      $region25: #{tpu_custom_call.1} parent=5 // pred_check
        %p177 = pneg %p176
      $region26: #{tpu_custom_call.1} parent=5 // pred_check_branch
        %179 = sbr.rel (%p177) target = $region28
      $region27: #{tpu_custom_call.1} parent=5 // pred_region
        // Predicated region
        $region29: #{tpu_custom_call.1} parent=27 // pred_check
          %p180 = pneg %p37
        $region30: #{tpu_custom_call.1} parent=27 // pred_check_branch
          %182 = sbr.rel (%p180) target = $region32
        $region31: #{tpu_custom_call.1} parent=27 // pred_region
          %s183 = sand.u32 %s27, 1
          %s184 = scalar_lea.sflag [#allocation4], %s183
          %s185 = sand.u32 %s27, 1
          %s186 = smul.addr %s185, 32
          %s187 = scalar_lea.vmem [#allocation3], %s186
          %s189 = ssub.s32 512, 512
          %190 = vsyncadd %s184, %s189
          %s191 = smul.addr %s17, 4
          %s192 = smul.addr %s191, 128
          %s193 = scalar_lea.hbm %s0, %s192
          %s194 = sshll.u32 %s187, 4
          %s195 = int_to_ptr.vmem [resolvable:$true] %s194
          %200 = dma.hbm_to_vmem [thread:$0]  %s193, 512, %s195, %s184, 128, 128, 8
        $region32: #{tpu_custom_call.1} parent=27 // pred_fallthru
          _
      $region28: #{tpu_custom_call.1} parent=5 // pred_fallthru
        _
      %p201 = scmp.le.s32.totalorder 1, %s17
      %p202 = scmp.lt.s32.totalorder %s17, 3
      %p203 = pnand %p201, %p202
      %p204 = pneg %p203
      // Predicated region
      $region33: #{tpu_custom_call.1} parent=5 // pred_check
        _
      $region34: #{tpu_custom_call.1} parent=5 // pred_check_branch
        %206 = sbr.rel (%p203) target = $region36
      $region35: #{tpu_custom_call.1} parent=5 // pred_region
        %s207 = ssub.s32 %s17, 1
        %s208 = sand.u32 %s30, 1
        %s209 = scalar_lea.sflag [#allocation4], %s208
        %s210 = sand.u32 %s30, 1
        %s211 = smul.addr %s210, 32
        %s212 = scalar_lea.vmem [#allocation3], %s211
        // Predicated region
        $region37: #{tpu_custom_call.1} parent=35 // pred_check
          %p213 = pneg %p43
        $region38: #{tpu_custom_call.1} parent=35 // pred_check_branch
          %215 = sbr.rel (%p213) target = $region40
        $region39: #{tpu_custom_call.1} parent=35 // pred_region
          %216 = dma.done %s209, 512
        $region40: #{tpu_custom_call.1} parent=35 // pred_fallthru
          _
        // Predicated region
        $region41: #{tpu_custom_call.1} parent=35 // pred_check
          %p217 = pneg %p64
        $region42: #{tpu_custom_call.1} parent=35 // pred_check_branch
          %219 = sbr.rel (%p217) target = $region44
        $region43: #{tpu_custom_call.1} parent=35 // pred_region
          %220 = dma.done [#allocation7], 512
        $region44: #{tpu_custom_call.1} parent=35 // pred_fallthru
          _
        // Predicated region
        $region45: #{tpu_custom_call.1} parent=35 // pred_check
          %p221 = pneg %p85
        $region46: #{tpu_custom_call.1} parent=35 // pred_check_branch
          %223 = sbr.rel (%p221) target = $region48
        $region47: #{tpu_custom_call.1} parent=35 // pred_region
          %224 = dma.done [#allocation7], 4096
        $region48: #{tpu_custom_call.1} parent=35 // pred_fallthru
          _
        %s225 = sand.u32 %s30, 1
        %s226 = scalar_lea.sflag [#allocation4], %s225
        %s227 = sand.u32 %s30, 1
        %s228 = smul.addr %s227, 32
        %s229 = scalar_lea.vmem [#allocation3], %s228
        %p230 = pneg %p43
        %p231 = pneg %p40
        %p232 = pneg %p64
        %p233 = pneg %p61
        %p234 = pneg %p85
        %p235 = pneg %p82
        %p236 = pneg %p106
        %p237 = pneg %p103
        %p238 = pneg %p132
        %p239 = pneg %p129
        %s240 = sand.u32 %s119, 1
        %s241 = scalar_lea.sflag [#allocation5], %s240
        %s242 = sand.u32 %s119, 1
        %s243 = smul.addr %s242, 64
        %s244 = scalar_lea.vmem [#allocation9], %s243
        %s245 = smul.u32 4, %s22
        %v246 = vld [vmem:[#allocation6] sm:$0xff]
        %v247 = vld [vmem:[#allocation6 + $0x8] sm:$0xff]
        %v248 = vld [vmem:[#allocation6 + $0x10] sm:$0xff]
        %v249 = vld [vmem:[#allocation6 + $0x18] sm:$0xff]
        %v250 = vld [vmem:[%s212] sm:$0xff]
        %v251 = vld [vmem:[%s212 + $0x8] sm:$0xff]
        %v252 = vld [vmem:[%s212 + $0x10] sm:$0xff]
        %v253 = vld [vmem:[%s212 + $0x18] sm:$0xff]
        %vm254 = vcmask 261120
        %v256 = vsel %vm254, %v246, 0
        %v259 = vsel %vm254, %v247, 0
        %v262 = vsel %vm254, %v248, 0
        %v265 = vsel %vm254, %v249, 0
        %267 = vmatprep.subr.mxu0 0.0
        %268 = vmatpush1.msra.mxu0 %v250
        %269 = vmatprep.subr.mxu0 0.0
        %270 = vmatpush1.msra.mxu0 %v251
        %271 = vmatprep.subr.mxu0 0.0
        %272 = vmatpush1.msra.mxu0 %v252
        %273 = vmatprep.subr.mxu0 0.0
        %274 = vmatpush1.msra.mxu0 %v253
        %275 = vmatprep.subr.mxu0 0.0
        %276 = vmatpush1.msra.mxu0 0.0
        %277 = vmatprep.subr.mxu0 0.0
        %278 = vmatpush1.msra.mxu0 0.0
        %279 = vmatprep.subr.mxu0 0.0
        %280 = vmatpush1.msra.mxu0 0.0
        %281 = vmatprep.subr.mxu0 0.0
        %282 = vmatpush1.msra.mxu0 0.0
        %283 = vmatprep.subr.mxu0 0.0
        %284 = vmatpush1.msra.mxu0 0.0
        %285 = vmatprep.subr.mxu0 0.0
        %286 = vmatpush1.msra.mxu0 0.0
        %287 = vmatprep.subr.mxu0 0.0
        %288 = vmatpush1.msra.mxu0 0.0
        %289 = vmatprep.subr.mxu0 0.0
        %290 = vmatpush1.msra.mxu0 0.0
        %291 = vmatprep.subr.mxu0 0.0
        %292 = vmatpush1.msra.mxu0 0.0
        %293 = vmatprep.subr.mxu0 0.0
        %294 = vmatpush1.msra.mxu0 0.0
        %295 = vmatprep.subr.mxu0 0.0
        %296 = vmatpush1.msra.mxu0 0.0
        %297 = vmatprep.subr.mxu0 0.0
        %298 = vmatpush1.msra.mxu0 0.0
        %299 = vmatprep.subr.mxu0 0.0
        %300 = vmatpush1.msra.mxu0 0.0
        %301 = vmatprep.subr.mxu0 0.0
        %302 = vmatpush1.msra.mxu0 0.0
        %303 = vmatprep.subr.mxu0 0.0
        %304 = vmatpush1.msra.mxu0 0.0
        %305 = vmatprep.subr.mxu0 0.0
        %306 = vmatpush1.msra.mxu0 0.0
        %307 = vmatprep.subr.mxu0 0.0
        %308 = vmatpush1.msra.mxu0 0.0
        %309 = vmatprep.subr.mxu0 0.0
        %310 = vmatpush1.msra.mxu0 0.0
        %311 = vmatprep.subr.mxu0 0.0
        %312 = vmatpush1.msra.mxu0 0.0
        %313 = vmatprep.subr.mxu0 0.0
        %314 = vmatpush1.msra.mxu0 0.0
        %315 = vmatprep.subr.mxu0 0.0
        %316 = vmatpush1.msra.mxu0 0.0
        %317 = vmatprep.subr.mxu0 0.0
        %318 = vmatpush1.msra.mxu0 0.0
        %319 = vmatprep.subr.mxu0 0.0
        %320 = vmatpush1.msra.mxu0 0.0
        %321 = vmatprep.subr.mxu0 0.0
        %322 = vmatpush1.msra.mxu0 0.0
        %323 = vmatprep.subr.mxu0 0.0
        %324 = vmatpush1.msra.mxu0 0.0
        %325 = vmatprep.subr.mxu0 0.0
        %326 = vmatpush1.msra.mxu0 0.0
        %327 = vmatprep.subr.mxu0 0.0
        %328 = vmatpush1.msra.mxu0 0.0
        %329 = vmatprep.subr.mxu0 0.0
        %330 = vmatpush1.msra.mxu0 0.0
        %331 = vmatprep.mubr.f32.mxu0 0.0
        %332 = vmatmul.mubr.f32.gmra.mrb[0].mxu0 %v256
        %v333 = vpop.f32.mrb[0].mxu0
        %v334 = vadd.f32 0.0, %v333
        %v335 = vpop.f32.mrb[0].mxu0
        %336 = vmatprep.mubr.f32.mxu0 0.0
        %337 = vmatmul.mubr.f32.gmra.mrb[0].mxu0 %v259
        %v338 = vpop.f32.mrb[0].mxu0
        %v339 = vadd.f32 0.0, %v338
        %v340 = vpop.f32.mrb[0].mxu0
        %341 = vmatprep.mubr.f32.mxu0 0.0
        %342 = vmatmul.mubr.f32.gmra.mrb[0].mxu0 %v262
        %v343 = vpop.f32.mrb[0].mxu0
        %v344 = vadd.f32 0.0, %v343
        %v345 = vpop.f32.mrb[0].mxu0
        %346 = vmatprep.mubr.f32.mxu0 0.0
        %347 = vmatmul.mubr.f32.gmra.mrb[0].mxu0 %v265
        %v348 = vpop.f32.mrb[0].mxu0
        %v349 = vadd.f32 0.0, %v348
        %v350 = vpop.f32.mrb[0].mxu0
        %351 = vdwg.mxu0
        %352 = vst [vmem:[#allocation2] sm:$0xff] %v334
        %353 = vst [vmem:[#allocation2 + $0x8] sm:$0xff] %v339
        %354 = vst [vmem:[#allocation2 + $0x10] sm:$0xff] %v344
        %355 = vst [vmem:[#allocation2 + $0x18] sm:$0xff] %v349
        %v356 = vld [vmem:[#allocation2] sm:$0xff]
        %v357 = vld [vmem:[#allocation2 + $0x8] sm:$0xff]
        %v358 = vld [vmem:[#allocation2 + $0x10] sm:$0xff]
        %v359 = vld [vmem:[#allocation2 + $0x18] sm:$0xff]
        %v360 = vld [vmem:[#allocation8] sm:$0xff]
        %v361 = vld [vmem:[#allocation8 + $0x8] sm:$0xff]
        %v362 = vld [vmem:[#allocation8 + $0x10] sm:$0xff]
        %v363 = vld [vmem:[#allocation8 + $0x18] sm:$0xff]
        %v364 = vld [vmem:[#allocation8 + $0x20] sm:$0xff]
        %v365 = vld [vmem:[#allocation8 + $0x28] sm:$0xff]
        %v366 = vld [vmem:[#allocation8 + $0x30] sm:$0xff]
        %v367 = vld [vmem:[#allocation8 + $0x38] sm:$0xff]
        %v368 = vld [vmem:[#allocation8 + $0x40] sm:$0xff]
        %v369 = vld [vmem:[#allocation8 + $0x48] sm:$0xff]
        %v370 = vld [vmem:[#allocation8 + $0x50] sm:$0xff]
        %v371 = vld [vmem:[#allocation8 + $0x58] sm:$0xff]
        %v372 = vld [vmem:[#allocation8 + $0x60] sm:$0xff]
        %v373 = vld [vmem:[#allocation8 + $0x68] sm:$0xff]
        %v374 = vld [vmem:[#allocation8 + $0x70] sm:$0xff]
        %v375 = vld [vmem:[#allocation8 + $0x78] sm:$0xff]
        %v376 = vld [vmem:[#allocation8 + $0x80] sm:$0xff]
        %v377 = vld [vmem:[#allocation8 + $0x88] sm:$0xff]
        %v378 = vld [vmem:[#allocation8 + $0x90] sm:$0xff]
        %v379 = vld [vmem:[#allocation8 + $0x98] sm:$0xff]
        %v380 = vld [vmem:[#allocation8 + $0xa0] sm:$0xff]
        %v381 = vld [vmem:[#allocation8 + $0xa8] sm:$0xff]
        %v382 = vld [vmem:[#allocation8 + $0xb0] sm:$0xff]
        %v383 = vld [vmem:[#allocation8 + $0xb8] sm:$0xff]
        %v384 = vld [vmem:[#allocation8 + $0xc0] sm:$0xff]
        %v385 = vld [vmem:[#allocation8 + $0xc8] sm:$0xff]
        %v386 = vld [vmem:[#allocation8 + $0xd0] sm:$0xff]
        %v387 = vld [vmem:[#allocation8 + $0xd8] sm:$0xff]
        %v388 = vld [vmem:[#allocation8 + $0xe0] sm:$0xff]
        %v389 = vld [vmem:[#allocation8 + $0xe8] sm:$0xff]
        %v390 = vld [vmem:[#allocation8 + $0xf0] sm:$0xff]
        %v391 = vld [vmem:[#allocation8 + $0xf8] sm:$0xff]
        %v392 = vld [vmem:[%s3] sm:$0x3]
        %v394 = vlaneseq
        %v395 = vshrl.u32 %v394, 7
        %v396 = vsub.s32 0, %v395
        %v397 = vrot.slane %v392, %v396
        %v398 = vlaneseq
        %v399 = vshrl.u32 %v398, 7
        %v400 = vsub.s32 1, %v399
        %v401 = vrot.slane %v392, %v400
        %404 = vmatprep.subr.mxu0 %v361
        %405 = vmatpush1.msra.mxu0 %v360
        %406 = vmatprep.subr.mxu0 %v363
        %407 = vmatpush1.msra.mxu0 %v362
        %408 = vmatprep.subr.mxu0 %v365
        %409 = vmatpush1.msra.mxu0 %v364
        %410 = vmatprep.subr.mxu0 %v367
        %411 = vmatpush1.msra.mxu0 %v366
        %412 = vmatprep.subr.mxu0 %v369
        %413 = vmatpush1.msra.mxu0 %v368
        %414 = vmatprep.subr.mxu0 %v371
        %415 = vmatpush1.msra.mxu0 %v370
        %416 = vmatprep.subr.mxu0 %v373
        %417 = vmatpush1.msra.mxu0 %v372
        %418 = vmatprep.subr.mxu0 %v375
        %419 = vmatpush1.msra.mxu0 %v374
        %420 = vmatprep.subr.mxu0 %v377
        %421 = vmatpush1.msra.mxu0 %v376
        %422 = vmatprep.subr.mxu0 %v379
        %423 = vmatpush1.msra.mxu0 %v378
        %424 = vmatprep.subr.mxu0 %v381
        %425 = vmatpush1.msra.mxu0 %v380
        %426 = vmatprep.subr.mxu0 %v383
        %427 = vmatpush1.msra.mxu0 %v382
        %428 = vmatprep.subr.mxu0 %v385
        %429 = vmatpush1.msra.mxu0 %v384
        %430 = vmatprep.subr.mxu0 %v387
        %431 = vmatpush1.msra.mxu0 %v386
        %432 = vmatprep.subr.mxu0 %v389
        %433 = vmatpush1.msra.mxu0 %v388
        %434 = vmatprep.subr.mxu0 %v391
        %435 = vmatpush1.msra.mxu0 %v390
        %436 = vmatprep.subr.mxu0 0.0
        %437 = vmatpush1.msra.mxu0 0.0
        %438 = vmatprep.subr.mxu0 0.0
        %439 = vmatpush1.msra.mxu0 0.0
        %440 = vmatprep.subr.mxu0 0.0
        %441 = vmatpush1.msra.mxu0 0.0
        %442 = vmatprep.subr.mxu0 0.0
        %443 = vmatpush1.msra.mxu0 0.0
        %444 = vmatprep.subr.mxu0 0.0
        %445 = vmatpush1.msra.mxu0 0.0
        %446 = vmatprep.subr.mxu0 0.0
        %447 = vmatpush1.msra.mxu0 0.0
        %448 = vmatprep.subr.mxu0 0.0
        %449 = vmatpush1.msra.mxu0 0.0
        %450 = vmatprep.subr.mxu0 0.0
        %451 = vmatpush1.msra.mxu0 0.0
        %452 = vmatprep.subr.mxu0 0.0
        %453 = vmatpush1.msra.mxu0 0.0
        %454 = vmatprep.subr.mxu0 0.0
        %455 = vmatpush1.msra.mxu0 0.0
        %456 = vmatprep.subr.mxu0 0.0
        %457 = vmatpush1.msra.mxu0 0.0
        %458 = vmatprep.subr.mxu0 0.0
        %459 = vmatpush1.msra.mxu0 0.0
        %460 = vmatprep.subr.mxu0 0.0
        %461 = vmatpush1.msra.mxu0 0.0
        %462 = vmatprep.subr.mxu0 0.0
        %463 = vmatpush1.msra.mxu0 0.0
        %464 = vmatprep.subr.mxu0 0.0
        %465 = vmatpush1.msra.mxu0 0.0
        %466 = vmatprep.subr.mxu0 0.0
        %467 = vmatpush1.msra.mxu0 0.0
        %468 = vmatprep.mubr.f32.mxu0 0.0
        %469 = vmatmul.mubr.f32.gmra.mrb[0].mxu0 %v356
        %v470 = vpop.f32.mrb[0].mxu0
        %v471 = vadd.f32 %v397, %v470
        %v472 = vpop.f32.mrb[0].mxu0
        %v473 = vadd.f32 %v401, %v472
        %474 = vmatprep.mubr.f32.mxu0 0.0
        %475 = vmatmul.mubr.f32.gmra.mrb[0].mxu0 %v357
        %v476 = vpop.f32.mrb[0].mxu0
        %v477 = vadd.f32 %v397, %v476
        %v478 = vpop.f32.mrb[0].mxu0
        %v479 = vadd.f32 %v401, %v478
        %480 = vmatprep.mubr.f32.mxu0 0.0
        %481 = vmatmul.mubr.f32.gmra.mrb[0].mxu0 %v358
        %v482 = vpop.f32.mrb[0].mxu0
        %v483 = vadd.f32 %v397, %v482
        %v484 = vpop.f32.mrb[0].mxu0
        %v485 = vadd.f32 %v401, %v484
        %486 = vmatprep.mubr.f32.mxu0 0.0
        %487 = vmatmul.mubr.f32.gmra.mrb[0].mxu0 %v359
        %v488 = vpop.f32.mrb[0].mxu0
        %v489 = vadd.f32 %v397, %v488
        %v490 = vpop.f32.mrb[0].mxu0
        %v491 = vadd.f32 %v401, %v490
        %492 = vdwg.mxu0
        %493 = vst [vmem:[%s244] sm:$0xff] %v471
        %494 = vst [vmem:[%s244 + $0x8] sm:$0xff] %v473
        %495 = vst [vmem:[%s244 + $0x10] sm:$0xff] %v477
        %496 = vst [vmem:[%s244 + $0x18] sm:$0xff] %v479
        %497 = vst [vmem:[%s244 + $0x20] sm:$0xff] %v483
        %498 = vst [vmem:[%s244 + $0x28] sm:$0xff] %v485
        %499 = vst [vmem:[%s244 + $0x30] sm:$0xff] %v489
        %500 = vst [vmem:[%s244 + $0x38] sm:$0xff] %v491
        %s501 = sand.u32 %s119, 1
        %s502 = scalar_lea.sflag [#allocation5], %s501
        %s503 = sand.u32 %s119, 1
        %s504 = smul.addr %s503, 64
        %s505 = scalar_lea.vmem [#allocation9], %s504
        // Predicated region
        $region49: #{tpu_custom_call.1} parent=35 // pred_check
          %p506 = pneg %p129
        $region50: #{tpu_custom_call.1} parent=35 // pred_check_branch
          %508 = sbr.rel (%p506) target = $region52
        $region51: #{tpu_custom_call.1} parent=35 // pred_region
          %s509 = smul.u32 4, %s22
          %s511 = ssub.s32 1024, 1024
          %512 = vsyncadd %s502, %s511
          %s513 = smul.addr %s509, 2
          %s514 = smul.addr %s513, 128
          %s515 = scalar_lea.hbm %s4, %s514
          %s516 = sshll.u32 %s505, 4
          %s517 = int_to_ptr.vmem [resolvable:$true] %s516
          %522 = dma.vmem_to_hbm [thread:$0]  %s517, 1024, %s515, %s502, 256, 256, 16
        $region52: #{tpu_custom_call.1} parent=35 // pred_fallthru
          _
      $region36: #{tpu_custom_call.1} parent=5 // pred_fallthru
        _
      %p523 = scmp.le.s32.totalorder 2, %s17
      // Predicated region
      $region53: #{tpu_custom_call.1} parent=5 // pred_check
        %p524 = pneg %p523
      $region54: #{tpu_custom_call.1} parent=5 // pred_check_branch
        %526 = sbr.rel (%p524) target = $region56
      $region55: #{tpu_custom_call.1} parent=5 // pred_region
        %s527 = ssub.s32 %s17, 2
        // Predicated region
        $region57: #{tpu_custom_call.1} parent=55 // pred_check
          %p528 = pneg %p135
        $region58: #{tpu_custom_call.1} parent=55 // pred_check_branch
          %530 = sbr.rel (%p528) target = $region60
        $region59: #{tpu_custom_call.1} parent=55 // pred_region
          %s531 = sand.u32 %s120, 1
          %s532 = scalar_lea.sflag [#allocation5], %s531
          %s533 = sand.u32 %s120, 1
          %s534 = smul.addr %s533, 64
          %s535 = scalar_lea.vmem [#allocation9], %s534
          %536 = dma.done %s532, 1024
        $region60: #{tpu_custom_call.1} parent=55 // pred_fallthru
          _
      $region56: #{tpu_custom_call.1} parent=5 // pred_fallthru
        _
    $region6: #{tpu_custom_call.1} parent=1 // loop_footer
      %s21 = sadd.s32 1, %s17
    $region7: #{tpu_custom_call.1} parent=1 // loop_footer_branch
      %16 = sbr.rel target = $region3
    $region8: #{tpu_custom_call.1} parent=1 // loop_exit
      _
    %537 = vsyncpa [#allocation4], 1
    %s538 = scalar_lea.sflag [#allocation4], 1
    %539 = vsyncpa %s538, 1
    %540 = vsyncpa [#allocation7], 1
    %541 = vsyncpa [#allocation5], 1
    %s542 = scalar_lea.sflag [#allocation5], 1
    %543 = vsyncpa %s542, 1

</llo_original>
